<compile_context>
chip_gen: v7x
topology: tpu7x:2x2x1
jax: 0.10.0
libtpu: 0.0.40
codegen_flags: <defaults>
</compile_context>

<pallas_src>
import functools
import math

import jax
import jax.numpy as jnp
from jax import lax
from jax.experimental import pallas as pl
from jax.experimental.pallas import tpu as pltpu


def _sdp_pointer_kernel(q_ref, w_ref, b_ref, keys_ref, *rest,
                        inv_temp, has_mask):
    if has_mask:
        mask_ref, out_ref = rest
    else:
        (out_ref,) = rest

    # ---- query projection (recomputed per tile; trivial MXU work) ---------
    q = q_ref[...]                                   # (tb, Dq)
    w = w_ref[...]                                   # (Dk, Dq)  PyTorch layout
    if q.dtype != w.dtype:                           # trace-time branch only
        q = q.astype(jnp.float32)
        w = w.astype(jnp.float32)
    proj = lax.dot_general(q, w,
                           dimension_numbers=(((1,), (1,)), ((), ())),
                           preferred_element_type=jnp.float32)      # (tb, Dk)
    proj = (proj + b_ref[...].astype(jnp.float32)) * inv_temp        # scale folded in

    # ---- pointer scores on the MXU, keys kept in native dtype/layout -------
    kdt = keys_ref.dtype
    proj_mm = proj if proj.dtype == kdt else proj.astype(kdt)

    tb = q_ref.shape[0]
    rows = []
    for i in range(tb):                              # small, unrolled at trace time
        k_i = keys_ref[i]                            # (ts, Dk)
        p_i = proj_mm[i:i + 1, :]                    # (1, Dk)
        # (1, Dk) . (ts, Dk)^T -> (1, ts): lane-dense row, f32 accumulate.
        r = lax.dot_general(p_i, k_i,
                            dimension_numbers=(((1,), (1,)), ((), ())),
                            preferred_element_type=jnp.float32)
        rows.append(r)
    logits = jnp.concatenate(rows, axis=0) if tb > 1 else rows[0]    # (tb, ts)

    if has_mask:
        logits = jnp.where(mask_ref[...] != 0, -jnp.inf, logits)
    out_ref[...] = logits.astype(out_ref.dtype)


def _round_up(x, m):
    return ((x + m - 1) // m) * m


def scaled_dot_product_pointer(query, keys, weight, bias, attn_mask=None,
                               *, block_b=8, block_s=None):
    """query: (B, Dq); keys: (B, S, Dk); weight: (Dk, Dq) [PyTorch Linear layout];
    bias: (Dk,); attn_mask: bool/int broadcastable to (B, S) or None.
    Returns (B, S) float32 attention logits (masked positions = -inf)."""
    B, Dq = query.shape
    Bk, S, Dk = keys.shape
    assert Bk == B and weight.shape == (Dk, Dq) and bias.shape[-1] == Dk
    inv_temp = 1.0 / math.sqrt(float(Dk))

    # ---- tile sizes (no operand padding; partial edge blocks are fine) ----
    if B <= 8:
        tb = B                                  # block dim == full dim is legal
    else:
        tb = _round_up(max(8, block_b), 8)      # sublane multiple

    keys_bytes = jnp.dtype(keys.dtype).itemsize
    if block_s is None:
        # ~2 MiB keys tile (4 MiB double-buffered): large enough that the
        # ~0.35 us per-grid-step overhead is negligible, small enough for
        # v7x's 64 MiB VMEM with plenty of headroom.
        budget = 2 * 1024 * 1024
        ts = max(128, (budget // max(1, tb * Dk * keys_bytes)) // 128 * 128)
    else:
        ts = max(128, _round_up(block_s, 128))  # lane-dense S tile
    if S <= ts:
        ts = S                                  # single block == full S dim

    b2 = bias.reshape(1, Dk)
    has_mask = attn_mask is not None

    operands = [query, weight, b2, keys]
    in_specs = [
        pl.BlockSpec((tb, Dq), lambda b, s: (b, 0)),         # query (B-resident)
        pl.BlockSpec((Dk, Dq), lambda b, s: (0, 0)),         # weight (resident)
        pl.BlockSpec((1, Dk), lambda b, s: (0, 0)),          # bias   (resident)
        pl.BlockSpec((tb, ts, Dk), lambda b, s: (b, s, 0)),  # keys   (streamed)
    ]
    if has_mask:
        mask = jnp.broadcast_to(attn_mask, (B, S)).astype(jnp.int8)
        operands.append(mask)
        in_specs.append(pl.BlockSpec((tb, ts), lambda b, s: (b, s)))

    # ---- explicit VMEM budget (double-buffered blocks + 3x headroom) ------
    est = 2 * (tb * ts * Dk * keys_bytes                   # keys
               + tb * ts * 4                               # out (f32)
               + (tb * ts if has_mask else 0)              # int8 mask
               + tb * Dq * jnp.dtype(query.dtype).itemsize
               + Dk * Dq * jnp.dtype(weight.dtype).itemsize
               + Dk * 4)
    vmem_limit = int(min(max(3 * est, 16 * 2**20), 48 * 2**20))

    grid = (pl.cdiv(B, tb), pl.cdiv(S, ts))
    kernel = functools.partial(_sdp_pointer_kernel,
                               inv_temp=inv_temp, has_mask=has_mask)
    return pl.pallas_call(
        kernel,
        out_shape=jax.ShapeDtypeStruct((B, S), jnp.float32),
        grid=grid,
        in_specs=in_specs,
        out_specs=pl.BlockSpec((tb, ts), lambda b, s: (b, s)),
        compiler_params=pltpu.CompilerParams(
            dimension_semantics=("parallel", "parallel"),
            vmem_limit_bytes=vmem_limit),
    )(*operands)


def _reference(query, keys, weight, bias, attn_mask):
    hi = jax.lax.Precision.HIGHEST
    proj = jnp.matmul(query, weight.T, precision=hi) + bias
    ref = jnp.einsum("bsd,bd->bs", keys, proj, precision=hi) / math.sqrt(
        keys.shape[-1])
    if attn_mask is not None:
        ref = jnp.where(jnp.broadcast_to(attn_mask, ref.shape), -jnp.inf, ref)
    return ref


def _check(query, keys, weight, bias, attn_mask, atol=1e-3, rtol=1e-3):
    out = scaled_dot_product_pointer(query, keys, weight, bias, attn_mask)
    out = jax.block_until_ready(out)
    ref = _reference(query, keys, weight, bias, attn_mask)
    assert out.shape == ref.shape
    if attn_mask is not None:
        mask_full = jnp.broadcast_to(attn_mask, ref.shape)
        assert bool(jnp.all(jnp.isneginf(out) == mask_full))
        finite = ~mask_full
        assert bool(jnp.allclose(jnp.where(finite, out, 0.0),
                                 jnp.where(finite, ref, 0.0),
                                 atol=atol, rtol=rtol))
    else:
        assert bool(jnp.allclose(out, ref, atol=atol, rtol=rtol))


if __name__ == "__main__":
    key = jax.random.PRNGKey(0)

    # ---- test 1: small shapes consistent with the module (single tile) ----
    B, S, Dq, Dk = 2, 8, 32, 32
    kq, kk, kw, kb, km, key = jax.random.split(key, 6)
    query = jax.random.normal(kq, (B, Dq), dtype=jnp.float32)
    keys = jax.random.normal(kk, (B, S, Dk), dtype=jnp.float32)
    weight = jax.random.normal(kw, (Dk, Dq), dtype=jnp.float32) * 0.1  # (out,in)
    bias = jax.random.normal(kb, (Dk,), dtype=jnp.float32) * 0.1
    attn_mask = jax.random.bernoulli(km, p=0.25, shape=(B, S))  # True = masked
    _check(query, keys, weight, bias, attn_mask)
    _check(query, keys, weight, bias, None)

    # ---- test 2: non-aligned shapes -> exercises partial edge blocks ------
    B2, S2, Dq2, Dk2 = 10, 300, 48, 64
    kq, kk, kw, kb, km, key = jax.random.split(key, 6)
    query2 = jax.random.normal(kq, (B2, Dq2), dtype=jnp.float32)
    keys2 = jax.random.normal(kk, (B2, S2, Dk2), dtype=jnp.float32)
    weight2 = jax.random.normal(kw, (Dk2, Dq2), dtype=jnp.float32) * 0.1
    bias2 = jax.random.normal(kb, (Dk2,), dtype=jnp.float32) * 0.1
    attn_mask2 = jax.random.bernoulli(km, p=0.25, shape=(B2, S2))
    out2 = scaled_dot_product_pointer(query2, keys2, weight2, bias2, attn_mask2,
                                      block_s=128)
    out2 = jax.block_until_ready(out2)
    ref2 = _reference(query2, keys2, weight2, bias2, attn_mask2)
    assert bool(jnp.all(jnp.isneginf(out2) == attn_mask2))
    finite2 = ~attn_mask2
    assert bool(jnp.allclose(jnp.where(finite2, out2, 0.0),
                             jnp.where(finite2, ref2, 0.0),
                             atol=1e-3, rtol=1e-3))

    print("KERNEL_OK")
</pallas_src>

<mosaic_0001>
module attributes {stable_mosaic.version = 11 : i64} {
  func.func @_sdp_pointer_kernel(%arg0: i32, %arg1: i32, %arg2: memref<2x32xf32, #tpu.memory_space<vmem>>, %arg3: memref<32x32xf32, #tpu.memory_space<vmem>>, %arg4: memref<1x32xf32, #tpu.memory_space<vmem>>, %arg5: memref<2x8x32xf32, #tpu.memory_space<vmem>>, %arg6: memref<2x8xi8, #tpu.memory_space<vmem>>, %arg7: memref<2x8xf32, #tpu.memory_space<vmem>>) attributes {dimension_semantics = [#tpu.dimension_semantics<parallel>, #tpu.dimension_semantics<parallel>], iteration_bounds = array<i64: 1, 1>, scalar_prefetch = 0 : i64, scratch_operands = 0 : i64, tpu.core_type = #tpu.core_type<tc>, window_params = [{transform_indices = @transform_0, window_bounds = array<i64: 2, 32>}, {pipeline_mode = #tpu.pipeline_mode<synchronous>, transform_indices = @transform_1, window_bounds = array<i64: 32, 32>}, {pipeline_mode = #tpu.pipeline_mode<synchronous>, transform_indices = @transform_2, window_bounds = array<i64: 1, 32>}, {transform_indices = @transform_3, window_bounds = array<i64: 2, 8, 32>}, {transform_indices = @transform_4, window_bounds = array<i64: 2, 8>}, {transform_indices = @transform_5, window_bounds = array<i64: 2, 8>}]} {
    %c0 = arith.constant 0 : index
    %c0_0 = arith.constant 0 : index
    %0 = vector.load %arg2[%c0, %c0_0] : memref<2x32xf32, #tpu.memory_space<vmem>>, vector<2x32xf32>
    %c0_1 = arith.constant 0 : index
    %c0_2 = arith.constant 0 : index
    %1 = vector.load %arg3[%c0_1, %c0_2] : memref<32x32xf32, #tpu.memory_space<vmem>>, vector<32x32xf32>
    %cst = arith.constant dense<0.000000e+00> : vector<2x32xf32>
    %2 = tpu.matmul %0, %1, %cst {dimension_numbers = #tpu.dot_dimension_numbers<[1], [1], [0], [0], [0, 0, 1, 0], [], []>} : vector<2x32xf32>, vector<32x32xf32>, vector<2x32xf32> -> vector<2x32xf32>
    %c0_3 = arith.constant 0 : index
    %c0_4 = arith.constant 0 : index
    %3 = vector.load %arg4[%c0_3, %c0_4] : memref<1x32xf32, #tpu.memory_space<vmem>>, vector<1x32xf32>
    %4 = vector.broadcast %3 : vector<1x32xf32> to vector<2x32xf32>
    %5 = arith.addf %2, %4 : vector<2x32xf32>
    %cst_5 = arith.constant 0.176776692 : f32
    %6 = vector.broadcast %cst_5 : f32 to vector<2x32xf32>
    %7 = arith.mulf %5, %6 : vector<2x32xf32>
    %c0_6 = arith.constant 0 : index
    %c0_7 = arith.constant 0 : index
    %c0_8 = arith.constant 0 : index
    %8 = vector.load %arg5[%c0_6, %c0_7, %c0_8] : memref<2x8x32xf32, #tpu.memory_space<vmem>>, vector<1x8x32xf32>
    %9 = vector.shape_cast %8 : vector<1x8x32xf32> to vector<8x32xf32>
    %10 = vector.extract_strided_slice %7 {offsets = [0, 0], sizes = [1, 32], strides = [1, 1]} : vector<2x32xf32> to vector<1x32xf32>
    %cst_9 = arith.constant dense<0.000000e+00> : vector<1x8xf32>
    %11 = tpu.matmul %10, %9, %cst_9 {dimension_numbers = #tpu.dot_dimension_numbers<[1], [1], [0], [0], [0, 0, 1, 0], [], []>} : vector<1x32xf32>, vector<8x32xf32>, vector<1x8xf32> -> vector<1x8xf32>
    %c1 = arith.constant 1 : index
    %c0_10 = arith.constant 0 : index
    %c0_11 = arith.constant 0 : index
    %12 = vector.load %arg5[%c1, %c0_10, %c0_11] : memref<2x8x32xf32, #tpu.memory_space<vmem>>, vector<1x8x32xf32>
    %13 = vector.shape_cast %12 : vector<1x8x32xf32> to vector<8x32xf32>
    %14 = vector.extract_strided_slice %7 {offsets = [1, 0], sizes = [1, 32], strides = [1, 1]} : vector<2x32xf32> to vector<1x32xf32>
    %cst_12 = arith.constant dense<0.000000e+00> : vector<1x8xf32>
    %15 = tpu.matmul %14, %13, %cst_12 {dimension_numbers = #tpu.dot_dimension_numbers<[1], [1], [0], [0], [0, 0, 1, 0], [], []>} : vector<1x32xf32>, vector<8x32xf32>, vector<1x8xf32> -> vector<1x8xf32>
    %16 = tpu.concatenate %11, %15 in 0 : vector<1x8xf32>, vector<1x8xf32> -> vector<2x8xf32>
    %c0_13 = arith.constant 0 : index
    %c0_14 = arith.constant 0 : index
    %17 = vector.load %arg6[%c0_13, %c0_14] : memref<2x8xi8, #tpu.memory_space<vmem>>, vector<2x8xi8>
    %c0_i8 = arith.constant 0 : i8
    %18 = vector.broadcast %c0_i8 : i8 to vector<2x8xi8>
    %19 = arith.cmpi ne, %17, %18 : vector<2x8xi8>
    %cst_15 = arith.constant 0xFF800000 : f32
    %20 = vector.broadcast %cst_15 : f32 to vector<2x8xf32>
    %21 = arith.select %19, %20, %16 : vector<2x8xi1>, vector<2x8xf32>
    %c0_16 = arith.constant 0 : index
    %c0_17 = arith.constant 0 : index
    %22 = vector.load %arg7[%c0_16, %c0_17] : memref<2x8xf32, #tpu.memory_space<vmem>>, vector<2x8xf32>
    tpu.vector_store %arg7[%c0_16, %c0_17], %21 {strides = array<i32>} : memref<2x8xf32, #tpu.memory_space<vmem>>, vector<2x8xf32>,
    return
  }
  func.func @transform_0(%arg0: i32, %arg1: i32) -> (i32, i32) {
    %c0_i32 = arith.constant 0 : i32
    %c0_i32_0 = arith.constant 0 : i32
    return %arg0, %c0_i32 : i32, i32
  }
  func.func @transform_1(%arg0: i32, %arg1: i32) -> (i32, i32) {
    %c0_i32 = arith.constant 0 : i32
    %c0_i32_0 = arith.constant 0 : i32
    %c0_i32_1 = arith.constant 0 : i32
    return %c0_i32, %c0_i32_0 : i32, i32
  }
  func.func @transform_2(%arg0: i32, %arg1: i32) -> (i32, i32) {
    %c0_i32 = arith.constant 0 : i32
    %c0_i32_0 = arith.constant 0 : i32
    %c0_i32_1 = arith.constant 0 : i32
    return %c0_i32, %c0_i32_0 : i32, i32
  }
  func.func @transform_3(%arg0: i32, %arg1: i32) -> (i32, i32, i32) {
    %c0_i32 = arith.constant 0 : i32
    %c0_i32_0 = arith.constant 0 : i32
    return %arg0, %arg1, %c0_i32 : i32, i32, i32
  }
  func.func @transform_4(%arg0: i32, %arg1: i32) -> (i32, i32) {
    %c0_i32 = arith.constant 0 : i32
    return %arg0, %arg1 : i32, i32
  }
  func.func @transform_5(%arg0: i32, %arg1: i32) -> (i32, i32) {
    %c0_i32 = arith.constant 0 : i32
    return %arg0, %arg1 : i32, i32
  }
}

</mosaic_0001>

<llo_original>
// kernel: tpu_custom_call.1
$region0: #{tpu_custom_call.1}
  #allocation0 [shape = 'u32[]', space=smem, size = 0x4, offset = 0x4, fixed_abs, tag = 'smem constant byte address 0x4 - core index']
  #allocation1 [shape = 'u32[144,128]{1,0:T(1,128)}', space=vmem, size = 0x12000, scoped, tag = 'internal scratch']
  %s0 = inlined_call_operand.hbm [shape: f32[2,32], index: 0, kind: input, shape index: {}]
  %s1 = inlined_call_operand.hbm [shape: f32[32,32], index: 1, kind: input, shape index: {}]
  %s2 = inlined_call_operand.vmem [shape: f32[1,32], index: 2, kind: input, shape index: {}]
  %s3 = inlined_call_operand.hbm [shape: f32[2,8,32], index: 3, kind: input, shape index: {}]
  %s4 = inlined_call_operand.vmem [shape: s8[2,8], index: 4, kind: input, shape index: {}]
  %s5 = inlined_call_operand.hbm [shape: f32[2,8], index: 5, kind: output, shape index: {}]
  %s6 = sld [smem:[#allocation0]]
  $region42: #{tpu_custom_call.1} parent=0
    _
  %s8 = ssub.s32 1, %s6
  %s9 = scalar_select 0, %s8, %s6
  $region1: #{tpu_custom_call.1} parent=0
    #allocation2 [shape = 'u8[1024]{0}', space=vmem, size = 0x400, scoped, tag = 'input window, operand 0, single buffered']
    #allocation3 [shape = 's32[1]{0}', space=sflag, size = 0x4, scoped, tag = 'scoped memory for tpu_custom_call.1']
    #allocation4 [shape = 's32[1]{0}', space=sflag, size = 0x4, scoped, tag = 'scoped memory for tpu_custom_call.1']
    #allocation5 [shape = 'u8[16384]{0}', space=vmem, size = 0x4000, scoped, tag = 'input window, operand 1, single buffered']
    #allocation6 [shape = 's32[1]{0}', space=sflag, size = 0x4, scoped, tag = 'scoped memory for tpu_custom_call.1']
    #allocation7 [shape = 'u8[8192]{0}', space=vmem, size = 0x2000, scoped, tag = 'input window, operand 3, single buffered']
    #allocation8 [shape = 'u8[1024]{0}', space=vmem, size = 0x400, scoped, tag = 'output window, operand 0, single buffered']
    %10 = vsyncpa [#allocation3], 0
    %11 = vsyncpa [#allocation6], 0
    %12 = vsyncpa [#allocation4], 0
    // Predicated region
    $region2: #{tpu_custom_call.1} parent=1 // pred_check
      _
    $region3: #{tpu_custom_call.1} parent=1 // pred_check_branch
      %14 = sbr.rel (0) target = $region5
    $region4: #{tpu_custom_call.1} parent=1 // pred_region
      %s16 = ssub.s32 32, 32
      %17 = vsyncadd [#allocation3], %s16
      %s19 = sshll.u32 [#allocation2], 4
      %s20 = int_to_ptr.vmem [resolvable:$true] %s19
      %22 = dma.hbm_to_vmem [thread:$0]  %s0, 32, %s20, [#allocation3]
    $region5: #{tpu_custom_call.1} parent=1 // pred_fallthru
      _
    // Predicated region
    $region6: #{tpu_custom_call.1} parent=1 // pred_check
      _
    $region7: #{tpu_custom_call.1} parent=1 // pred_check_branch
      %24 = sbr.rel (0) target = $region9
    $region8: #{tpu_custom_call.1} parent=1 // pred_region
      %s26 = ssub.s32 512, 512
      %27 = vsyncadd [#allocation6], %s26
      %s28 = sshll.u32 [#allocation5], 4
      %s29 = int_to_ptr.vmem [resolvable:$true] %s28
      %34 = dma.hbm_to_vmem [thread:$0]  %s1, 512, %s29, [#allocation6], 128, 128, 8
    $region9: #{tpu_custom_call.1} parent=1 // pred_fallthru
      _
    // Predicated region
    $region10: #{tpu_custom_call.1} parent=1 // pred_check
      _
    $region11: #{tpu_custom_call.1} parent=1 // pred_check_branch
      %36 = sbr.rel (0) target = $region13
    $region12: #{tpu_custom_call.1} parent=1 // pred_region
      _
    $region13: #{tpu_custom_call.1} parent=1 // pred_fallthru
      _
    // Predicated region
    $region14: #{tpu_custom_call.1} parent=1 // pred_check
      _
    $region15: #{tpu_custom_call.1} parent=1 // pred_check_branch
      %38 = sbr.rel (0) target = $region17
    $region16: #{tpu_custom_call.1} parent=1 // pred_region
      %s40 = ssub.s32 256, 256
      %41 = vsyncadd [#allocation6], %s40
      %s42 = sshll.u32 [#allocation7], 4
      %s43 = int_to_ptr.vmem [resolvable:$true] %s42
      %48 = dma.hbm_to_vmem [thread:$0]  %s3, 256, %s43, [#allocation6], 128, 128, 8
    $region17: #{tpu_custom_call.1} parent=1 // pred_fallthru
      _
    // Predicated region
    $region18: #{tpu_custom_call.1} parent=1 // pred_check
      _
    $region19: #{tpu_custom_call.1} parent=1 // pred_check_branch
      %50 = sbr.rel (0) target = $region21
    $region20: #{tpu_custom_call.1} parent=1 // pred_region
      _
    $region21: #{tpu_custom_call.1} parent=1 // pred_fallthru
      _
    // Predicated region
    $region22: #{tpu_custom_call.1} parent=1 // pred_check
      _
    $region23: #{tpu_custom_call.1} parent=1 // pred_check_branch
      %52 = sbr.rel (0) target = $region25
    $region24: #{tpu_custom_call.1} parent=1 // pred_region
      %53 = dma.done [#allocation3], 32
    $region25: #{tpu_custom_call.1} parent=1 // pred_fallthru
      _
    // Predicated region
    $region26: #{tpu_custom_call.1} parent=1 // pred_check
      _
    $region27: #{tpu_custom_call.1} parent=1 // pred_check_branch
      %55 = sbr.rel (0) target = $region29
    $region28: #{tpu_custom_call.1} parent=1 // pred_region
      %56 = dma.done [#allocation6], 512
    $region29: #{tpu_custom_call.1} parent=1 // pred_fallthru
      _
    // Predicated region
    $region30: #{tpu_custom_call.1} parent=1 // pred_check
      _
    $region31: #{tpu_custom_call.1} parent=1 // pred_check_branch
      %58 = sbr.rel (0) target = $region33
    $region32: #{tpu_custom_call.1} parent=1 // pred_region
      %59 = dma.done [#allocation6], 256
    $region33: #{tpu_custom_call.1} parent=1 // pred_fallthru
      _
    %v62 = vld [vmem:[#allocation2] sm:$0x3]
    %v63 = vld [vmem:[#allocation5] sm:$0xff]
    %v64 = vld [vmem:[#allocation5 + $0x8] sm:$0xff]
    %v65 = vld [vmem:[#allocation5 + $0x10] sm:$0xff]
    %v66 = vld [vmem:[#allocation5 + $0x18] sm:$0xff]
    %v67 = vld [vmem:[%s2] sm:$0x1]
    %v69 = vlaneseq
    %v70 = vshrl.u32 %v69, 7
    %v71 = vsub.s32 0, %v70
    %v72 = vrot.slane %v67, %v71
    %vm74 = vcmask 261120
    %v76 = vsel %vm74, %v62, 0
    %v79 = vsel %vm74, %v63, 0
    %v82 = vsel %vm74, %v64, 0
    %v85 = vsel %vm74, %v65, 0
    %v88 = vsel %vm74, %v66, 0
    %90 = vmatprep.subr.mxu0 0.0
    %91 = vmatpush1.xpose.msra.mxu0 %v79
    %92 = vmatprep.subr.mxu0 0.0
    %93 = vmatpush1.xpose.msra.mxu0 %v82
    %94 = vmatprep.subr.mxu0 0.0
    %95 = vmatpush1.xpose.msra.mxu0 %v85
    %96 = vmatprep.subr.mxu0 0.0
    %97 = vmatpush1.xpose.msra.mxu0 %v88
    %98 = vmatprep.subr.mxu0 0.0
    %99 = vmatpush1.xpose.msra.mxu0 0.0
    %100 = vmatprep.subr.mxu0 0.0
    %101 = vmatpush1.xpose.msra.mxu0 0.0
    %102 = vmatprep.subr.mxu0 0.0
    %103 = vmatpush1.xpose.msra.mxu0 0.0
    %104 = vmatprep.subr.mxu0 0.0
    %105 = vmatpush1.xpose.msra.mxu0 0.0
    %106 = vmatprep.subr.mxu0 0.0
    %107 = vmatpush1.xpose.msra.mxu0 0.0
    %108 = vmatprep.subr.mxu0 0.0
    %109 = vmatpush1.xpose.msra.mxu0 0.0
    %110 = vmatprep.subr.mxu0 0.0
    %111 = vmatpush1.xpose.msra.mxu0 0.0
    %112 = vmatprep.subr.mxu0 0.0
    %113 = vmatpush1.xpose.msra.mxu0 0.0
    %114 = vmatprep.subr.mxu0 0.0
    %115 = vmatpush1.xpose.msra.mxu0 0.0
    %116 = vmatprep.subr.mxu0 0.0
    %117 = vmatpush1.xpose.msra.mxu0 0.0
    %118 = vmatprep.subr.mxu0 0.0
    %119 = vmatpush1.xpose.msra.mxu0 0.0
    %120 = vmatprep.subr.mxu0 0.0
    %121 = vmatpush1.xpose.msra.mxu0 0.0
    %122 = vmatprep.subr.mxu0 0.0
    %123 = vmatpush1.xpose.msra.mxu0 0.0
    %124 = vmatprep.subr.mxu0 0.0
    %125 = vmatpush1.xpose.msra.mxu0 0.0
    %126 = vmatprep.subr.mxu0 0.0
    %127 = vmatpush1.xpose.msra.mxu0 0.0
    %128 = vmatprep.subr.mxu0 0.0
    %129 = vmatpush1.xpose.msra.mxu0 0.0
    %130 = vmatprep.subr.mxu0 0.0
    %131 = vmatpush1.xpose.msra.mxu0 0.0
    %132 = vmatprep.subr.mxu0 0.0
    %133 = vmatpush1.xpose.msra.mxu0 0.0
    %134 = vmatprep.subr.mxu0 0.0
    %135 = vmatpush1.xpose.msra.mxu0 0.0
    %136 = vmatprep.subr.mxu0 0.0
    %137 = vmatpush1.xpose.msra.mxu0 0.0
    %138 = vmatprep.subr.mxu0 0.0
    %139 = vmatpush1.xpose.msra.mxu0 0.0
    %140 = vmatprep.subr.mxu0 0.0
    %141 = vmatpush1.xpose.msra.mxu0 0.0
    %142 = vmatprep.subr.mxu0 0.0
    %143 = vmatpush1.xpose.msra.mxu0 0.0
    %144 = vmatprep.subr.mxu0 0.0
    %145 = vmatpush1.xpose.msra.mxu0 0.0
    %146 = vmatprep.subr.mxu0 0.0
    %147 = vmatpush1.xpose.msra.mxu0 0.0
    %148 = vmatprep.subr.mxu0 0.0
    %149 = vmatpush1.xpose.msra.mxu0 0.0
    %150 = vmatprep.subr.mxu0 0.0
    %151 = vmatpush1.xpose.msra.mxu0 0.0
    %152 = vmatprep.subr.mxu0 0.0
    %153 = vmatpush1.xpose.msra.mxu0 0.0
    %154 = vmatprep.mubr.f32.mxu0 0.0
    %155 = vmatmul.mubr.f32.gmra.mrb[0].mxu0 %v76
    %v156 = vpop.f32.mrb[0].mxu0
    %v157 = vadd.f32 %v72, %v156
    %v158 = vpop.f32.mrb[0].mxu0
    %159 = vdwg.mxu0
    %v160 = vmul.f32 %v157, 0.17677669
    %v161 = vld [vmem:[#allocation7] sm:$0xff]
    %v163 = vsel %vm74, %v160, 0
    %v166 = vsel %vm74, %v161, 0
    %168 = vmatprep.subr.mxu0 0.0
    %169 = vmatpush1.xpose.msra.mxu0 %v166
    %170 = vmatprep.subr.mxu0 0.0
    %171 = vmatpush1.xpose.msra.mxu0 0.0
    %172 = vmatprep.subr.mxu0 0.0
    %173 = vmatpush1.xpose.msra.mxu0 0.0
    %174 = vmatprep.subr.mxu0 0.0
    %175 = vmatpush1.xpose.msra.mxu0 0.0
    %176 = vmatprep.subr.mxu0 0.0
    %177 = vmatpush1.xpose.msra.mxu0 0.0
    %178 = vmatprep.subr.mxu0 0.0
    %179 = vmatpush1.xpose.msra.mxu0 0.0
    %180 = vmatprep.subr.mxu0 0.0
    %181 = vmatpush1.xpose.msra.mxu0 0.0
    %182 = vmatprep.subr.mxu0 0.0
    %183 = vmatpush1.xpose.msra.mxu0 0.0
    %184 = vmatprep.subr.mxu0 0.0
    %185 = vmatpush1.xpose.msra.mxu0 0.0
    %186 = vmatprep.subr.mxu0 0.0
    %187 = vmatpush1.xpose.msra.mxu0 0.0
    %188 = vmatprep.subr.mxu0 0.0
    %189 = vmatpush1.xpose.msra.mxu0 0.0
    %190 = vmatprep.subr.mxu0 0.0
    %191 = vmatpush1.xpose.msra.mxu0 0.0
    %192 = vmatprep.subr.mxu0 0.0
    %193 = vmatpush1.xpose.msra.mxu0 0.0
    %194 = vmatprep.subr.mxu0 0.0
    %195 = vmatpush1.xpose.msra.mxu0 0.0
    %196 = vmatprep.subr.mxu0 0.0
    %197 = vmatpush1.xpose.msra.mxu0 0.0
    %198 = vmatprep.subr.mxu0 0.0
    %199 = vmatpush1.xpose.msra.mxu0 0.0
    %200 = vmatprep.subr.mxu0 0.0
    %201 = vmatpush1.xpose.msra.mxu0 0.0
    %202 = vmatprep.subr.mxu0 0.0
    %203 = vmatpush1.xpose.msra.mxu0 0.0
    %204 = vmatprep.subr.mxu0 0.0
    %205 = vmatpush1.xpose.msra.mxu0 0.0
    %206 = vmatprep.subr.mxu0 0.0
    %207 = vmatpush1.xpose.msra.mxu0 0.0
    %208 = vmatprep.subr.mxu0 0.0
    %209 = vmatpush1.xpose.msra.mxu0 0.0
    %210 = vmatprep.subr.mxu0 0.0
    %211 = vmatpush1.xpose.msra.mxu0 0.0
    %212 = vmatprep.subr.mxu0 0.0
    %213 = vmatpush1.xpose.msra.mxu0 0.0
    %214 = vmatprep.subr.mxu0 0.0
    %215 = vmatpush1.xpose.msra.mxu0 0.0
    %216 = vmatprep.subr.mxu0 0.0
    %217 = vmatpush1.xpose.msra.mxu0 0.0
    %218 = vmatprep.subr.mxu0 0.0
    %219 = vmatpush1.xpose.msra.mxu0 0.0
    %220 = vmatprep.subr.mxu0 0.0
    %221 = vmatpush1.xpose.msra.mxu0 0.0
    %222 = vmatprep.subr.mxu0 0.0
    %223 = vmatpush1.xpose.msra.mxu0 0.0
    %224 = vmatprep.subr.mxu0 0.0
    %225 = vmatpush1.xpose.msra.mxu0 0.0
    %226 = vmatprep.subr.mxu0 0.0
    %227 = vmatpush1.xpose.msra.mxu0 0.0
    %228 = vmatprep.subr.mxu0 0.0
    %229 = vmatpush1.xpose.msra.mxu0 0.0
    %230 = vmatprep.subr.mxu0 0.0
    %231 = vmatpush1.xpose.msra.mxu0 0.0
    %232 = vmatprep.mubr.f32.mxu0 0.0
    %233 = vmatmul.mubr.f32.gmra.mrb[0].mxu0 %v163
    %v234 = vpop.f32.mrb[0].mxu0
    %v235 = vadd.f32 0.0, %v234
    %v236 = vpop.f32.mrb[0].mxu0
    %237 = vdwg.mxu0
    %s238 = scalar_lea.vmem [#allocation7], 8
    %v239 = vld [vmem:[%s238] sm:$0xff]
    %v240 = vrot.slane %v160, 1
    %v241 = vsel %vm74, %v240, 0
    %v244 = vsel %vm74, %v239, 0
    %246 = vmatprep.subr.mxu0 0.0
    %247 = vmatpush1.xpose.msra.mxu0 %v244
    %248 = vmatprep.subr.mxu0 0.0
    %249 = vmatpush1.xpose.msra.mxu0 0.0
    %250 = vmatprep.subr.mxu0 0.0
    %251 = vmatpush1.xpose.msra.mxu0 0.0
    %252 = vmatprep.subr.mxu0 0.0
    %253 = vmatpush1.xpose.msra.mxu0 0.0
    %254 = vmatprep.subr.mxu0 0.0
    %255 = vmatpush1.xpose.msra.mxu0 0.0
    %256 = vmatprep.subr.mxu0 0.0
    %257 = vmatpush1.xpose.msra.mxu0 0.0
    %258 = vmatprep.subr.mxu0 0.0
    %259 = vmatpush1.xpose.msra.mxu0 0.0
    %260 = vmatprep.subr.mxu0 0.0
    %261 = vmatpush1.xpose.msra.mxu0 0.0
    %262 = vmatprep.subr.mxu0 0.0
    %263 = vmatpush1.xpose.msra.mxu0 0.0
    %264 = vmatprep.subr.mxu0 0.0
    %265 = vmatpush1.xpose.msra.mxu0 0.0
    %266 = vmatprep.subr.mxu0 0.0
    %267 = vmatpush1.xpose.msra.mxu0 0.0
    %268 = vmatprep.subr.mxu0 0.0
    %269 = vmatpush1.xpose.msra.mxu0 0.0
    %270 = vmatprep.subr.mxu0 0.0
    %271 = vmatpush1.xpose.msra.mxu0 0.0
    %272 = vmatprep.subr.mxu0 0.0
    %273 = vmatpush1.xpose.msra.mxu0 0.0
    %274 = vmatprep.subr.mxu0 0.0
    %275 = vmatpush1.xpose.msra.mxu0 0.0
    %276 = vmatprep.subr.mxu0 0.0
    %277 = vmatpush1.xpose.msra.mxu0 0.0
    %278 = vmatprep.subr.mxu0 0.0
    %279 = vmatpush1.xpose.msra.mxu0 0.0
    %280 = vmatprep.subr.mxu0 0.0
    %281 = vmatpush1.xpose.msra.mxu0 0.0
    %282 = vmatprep.subr.mxu0 0.0
    %283 = vmatpush1.xpose.msra.mxu0 0.0
    %284 = vmatprep.subr.mxu0 0.0
    %285 = vmatpush1.xpose.msra.mxu0 0.0
    %286 = vmatprep.subr.mxu0 0.0
    %287 = vmatpush1.xpose.msra.mxu0 0.0
    %288 = vmatprep.subr.mxu0 0.0
    %289 = vmatpush1.xpose.msra.mxu0 0.0
    %290 = vmatprep.subr.mxu0 0.0
    %291 = vmatpush1.xpose.msra.mxu0 0.0
    %292 = vmatprep.subr.mxu0 0.0
    %293 = vmatpush1.xpose.msra.mxu0 0.0
    %294 = vmatprep.subr.mxu0 0.0
    %295 = vmatpush1.xpose.msra.mxu0 0.0
    %296 = vmatprep.subr.mxu0 0.0
    %297 = vmatpush1.xpose.msra.mxu0 0.0
    %298 = vmatprep.subr.mxu0 0.0
    %299 = vmatpush1.xpose.msra.mxu0 0.0
    %300 = vmatprep.subr.mxu0 0.0
    %301 = vmatpush1.xpose.msra.mxu0 0.0
    %302 = vmatprep.subr.mxu0 0.0
    %303 = vmatpush1.xpose.msra.mxu0 0.0
    %304 = vmatprep.subr.mxu0 0.0
    %305 = vmatpush1.xpose.msra.mxu0 0.0
    %306 = vmatprep.subr.mxu0 0.0
    %307 = vmatpush1.xpose.msra.mxu0 0.0
    %308 = vmatprep.subr.mxu0 0.0
    %309 = vmatpush1.xpose.msra.mxu0 0.0
    %310 = vmatprep.mubr.f32.mxu0 0.0
    %311 = vmatmul.mubr.f32.gmra.mrb[0].mxu0 %v241
    %v312 = vpop.f32.mrb[0].mxu0
    %v313 = vadd.f32 0.0, %v312
    %v314 = vpop.f32.mrb[0].mxu0
    %315 = vdwg.mxu0
    %v317 = vrot.slane %v313, 7
    %vm319 = vcmask 1040384
    %v320 = vsel %vm319, %v235, %v317
    %v321 = vld [vmem:[%s4] sm:$0x1]
    %vm322 = vnez %v321
    %v323 = vsel %vm322, 16843009, 0
    %v324 = vunpack.c.0.s8 %v323
    %vm325 = vcmp.ne.s32.totalorder %v324, 0
    %v326 = vsel %vm325, -inf, %v320
    %vm327 = vcmask 58368
    %328 = vst.msk [vmem:[#allocation8] sm:$0x3] %vm327, %v326
    // Predicated region
    $region34: #{tpu_custom_call.1} parent=1 // pred_check
      _
    $region35: #{tpu_custom_call.1} parent=1 // pred_check_branch
      %330 = sbr.rel (0) target = $region37
    $region36: #{tpu_custom_call.1} parent=1 // pred_region
      %s332 = ssub.s32 32, 32
      %333 = vsyncadd [#allocation4], %s332
      %s335 = sshll.u32 [#allocation8], 4
      %s336 = int_to_ptr.vmem [resolvable:$true] %s335
      %338 = dma.vmem_to_hbm [thread:$0]  %s336, 32, %s5, [#allocation4]
    $region37: #{tpu_custom_call.1} parent=1 // pred_fallthru
      _
    // Predicated region
    $region38: #{tpu_custom_call.1} parent=1 // pred_check
      _
    $region39: #{tpu_custom_call.1} parent=1 // pred_check_branch
      %340 = sbr.rel (0) target = $region41
    $region40: #{tpu_custom_call.1} parent=1 // pred_region
      %341 = dma.done [#allocation4], 32
    $region41: #{tpu_custom_call.1} parent=1 // pred_fallthru
      _
    %342 = vsyncpa [#allocation3], 1
    %343 = vsyncpa [#allocation6], 1
    %344 = vsyncpa [#allocation4], 1

</llo_original>
